<compile_context>
chip_gen: v7x
topology: tpu7x:2x2x1
jax: 0.10.0
libtpu: 0.0.40
codegen_flags: <defaults>
</compile_context>

<pallas_src>
import math

import jax
import jax.numpy as jnp
from jax.experimental import pallas as pl
from jax.experimental.pallas import tpu as pltpu


def _attention_pooling_kernel(x_ref, w_ref, o_ref):
    # x_ref: (TB, L, D) native dtype
    # w_ref: (d_out, D)  native dtype, 1/sqrt(d_in) already folded in
    # o_ref: (TB, d_out*D) when D % 128 != 0 (lane-dense flattened store),
    #        (TB, d_out, D) when D is already a lane-aligned multiple of 128.
    tb, L, D = x_ref.shape
    d_out = w_ref.shape[0]

    x = x_ref[...]
    # Broadcast the tiny shared weight across the batch tile once (hoisted).
    w_b = jnp.broadcast_to(w_ref[...], (tb, d_out, D))

    # Routing scores with L on the lane axis: (TB, d_out, L), f32 accumulation.
    # Contraction on both minor dims -- the standard Q @ K^T attention form.
    s = jax.lax.dot_general(
        w_b, x,
        (((2,), (2,)), ((0,), (0,))),
        preferred_element_type=jnp.float32,
    )                                              # (TB, d_out, L), f32

    # Numerically-stable softmax over the lane (L) axis; the 1/sum is folded
    # into the (much smaller) pooled output below.
    m = jnp.max(s, axis=-1, keepdims=True)         # (TB, d_out, 1)
    e = jnp.exp(s - m)                             # (TB, d_out, L)
    denom = jnp.sum(e, axis=-1)                    # (TB, d_out)

    # Pooled output: canonical batched (d_out, L) @ (L, D), f32 accumulation.
    # Probabilities cast to x's dtype keep the 2x MXU rate for bf16 inputs.
    out = jax.lax.dot_general(
        e.astype(x.dtype), x,
        (((2,), (1,)), ((0,), (0,))),
        preferred_element_type=jnp.float32,
    )                                              # (TB, d_out, D), f32

    # EUP approximate reciprocal (otherwise-idle slot) + one Newton step so
    # the result stays at f32 accuracy (denom >= 1 after max subtraction).
    inv = pl.reciprocal(denom, approx=True)
    inv = inv * (2.0 - denom * inv)
    out = (out * inv[:, :, None]).astype(o_ref.dtype)

    if o_ref.ndim == 2:
        # Narrow / unaligned D: flatten for an unmasked, lane-dense store.
        o_ref[...] = out.reshape(tb, d_out * D)
    else:
        # D is a lane-aligned multiple of 128: store directly, no relayout.
        o_ref[...] = out


def _round_up(n, m):
    return ((n + m - 1) // m) * m


def _cdiv(a, b):
    return -(-a // b)


def _sublane(itemsize):
    # Sublane tile: 8 rows for 4-byte dtypes, 16 for 2-byte, 32 for 1-byte.
    return max(8, 32 // max(int(itemsize), 1))


def _tpu_params():
    kind = ""
    try:
        kind = jax.devices()[0].device_kind.lower()
    except Exception:
        pass
    if "v7" in kind or "tpu7" in kind:
        # v7x: 64 MiB physical VMEM per TensorCore, 2 TensorCores per chip.
        return dict(vmem_budget=44 << 20, vmem_limit=48 << 20,
                    vmem_phys=60 << 20, max_block_bytes=8 << 20, num_cores=2)
    # v5e / v6e / default: 128 MiB physical VMEM, 1 TensorCore, HBM-bound.
    return dict(vmem_budget=56 << 20, vmem_limit=64 << 20,
                vmem_phys=120 << 20, max_block_bytes=16 << 20, num_cores=1)


def _estimate_vmem_bytes(tb, L, D, d_out, itemsize, flatten_out):
    """Upper-bound VMEM: double-buffered blocks + lane/sublane-padded temps."""
    lane = 128
    sub_in = _sublane(itemsize)
    Dp = _round_up(D, lane)
    Lp = _round_up(L, lane)
    dop8 = _round_up(d_out, 8)
    dopi = _round_up(d_out, sub_in)

    x_block = tb * _round_up(L, sub_in) * Dp * itemsize
    w_block = dopi * Dp * itemsize
    if flatten_out:
        o_block = _round_up(tb, sub_in) * _round_up(d_out * D, lane) * itemsize
    else:
        o_block = tb * dopi * Dp * itemsize
    pipelined = 2 * (x_block + w_block + o_block)      # double buffering

    s_f32 = tb * dop8 * Lp * 4            # scores
    e_f32 = tb * dop8 * Lp * 4            # exp(s - m)
    e_cast = tb * dopi * Lp * itemsize    # probs cast to x dtype
    w_bcast = tb * dopi * Dp * itemsize   # batch-broadcast weight
    out_f32 = tb * dop8 * Dp * 4          # f32 accumulation
    interm = s_f32 + e_f32 + e_cast + w_bcast + out_f32

    return pipelined + interm + (1 << 20)  # ~1 MiB slack


def _choose_tb(B, L, D, d_out, itemsize, flatten_out, *, vmem_budget,
               max_block_bytes, num_cores):
    lane = 128
    sub = _sublane(itemsize)

    def x_block_bytes(tb):
        return tb * _round_up(L, sub) * _round_up(D, lane) * itemsize

    def fits(tb):
        return (x_block_bytes(tb) <= max_block_bytes and
                _estimate_vmem_bytes(tb, L, D, d_out, itemsize, flatten_out)
                <= vmem_budget)

    # Candidates: the full batch, then sublane-aligned tiles, descending.
    cands = [B] + [k * sub for k in range(B // sub, 0, -1) if k * sub < B]
    tb = None
    for c in cands:
        if fits(c):
            tb = c
            break
    if tb is None:
        # Even one sublane of batch rows blows the budget (very long L*D).
        # TODO(synk): add an L-axis grid with a flash-style online-softmax
        # accumulator so long sequences keep per-step VMEM bounded.
        tb = min(B, sub)

    # On 2-TensorCore chips (v7x) prefer an even grid-step count so the
    # "parallel" batch axis load-balances across both cores.
    if num_cores >= 2 and B > sub:
        steps = _cdiv(B, tb)
        if steps % 2 == 1:
            alt = _round_up(_cdiv(B, steps + 1), sub)
            if 0 < alt < B and fits(alt) and _cdiv(B, alt) % 2 == 0:
                tb = alt
    return tb


def attention_pooling(x, inducing_points, *, max_block_bytes=None,
                      vmem_limit_bytes=None):
    """x: (B, L, d_in), inducing_points: (1, d_out, d_in) -> (B, d_out, d_in)."""
    B, L, D = x.shape
    n_out, d_out, d_in = inducing_points.shape
    assert d_in == D, "last dim of x must equal d_in"
    assert n_out == 1, "expand(B, 1, 1) requires a broadcastable leading dim"

    # Fold the 1/sqrt(d_in) softmax temperature into the batch-shared weight.
    # (d_out, D) is already the canonical (M, K) lhs orientation for the
    # (TB, d_out, L) score matmul -- no in-kernel weight transpose needed.
    scale = 1.0 / math.sqrt(d_in)
    w = (inducing_points[0] * scale).astype(x.dtype)        # (d_out, D)

    params = _tpu_params()
    if max_block_bytes is None:
        max_block_bytes = params["max_block_bytes"]
    itemsize = x.dtype.itemsize

    # Only flatten the output when D is not already a lane-aligned multiple of
    # 128; otherwise the (TB, d_out, D) store is already unmasked/lane-dense.
    flatten_out = (D % 128) != 0

    tb = _choose_tb(B, L, D, d_out, itemsize, flatten_out,
                    vmem_budget=params["vmem_budget"],
                    max_block_bytes=max_block_bytes,
                    num_cores=params["num_cores"])
    grid = (_cdiv(B, tb),)

    if vmem_limit_bytes is None:
        est = _estimate_vmem_bytes(tb, L, D, d_out, itemsize, flatten_out)
        vmem_limit_bytes = min(params["vmem_phys"],
                               max(params["vmem_limit"], int(est * 1.25)))

    if flatten_out:
        out_shape = jax.ShapeDtypeStruct((B, d_out * D), x.dtype)
        out_spec = pl.BlockSpec((tb, d_out * D), lambda b: (b, 0))
    else:
        out_shape = jax.ShapeDtypeStruct((B, d_out, D), x.dtype)
        out_spec = pl.BlockSpec((tb, d_out, D), lambda b: (b, 0, 0))

    out = pl.pallas_call(
        _attention_pooling_kernel,
        out_shape=out_shape,
        grid=grid,
        in_specs=[
            pl.BlockSpec((tb, L, D), lambda b: (b, 0, 0)),
            pl.BlockSpec((d_out, D), lambda b: (0, 0)),   # resident shared weight
        ],
        out_specs=out_spec,
        compiler_params=pltpu.CompilerParams(
            dimension_semantics=("parallel",),
            vmem_limit_bytes=vmem_limit_bytes,
        ),
    )(x, w)

    if flatten_out:
        out = out.reshape(B, d_out, D)
    return out


def _reference(x, inducing_points):
    # Pure-JAX reference mirroring the PyTorch forward (f32 throughout).
    w = inducing_points[0].astype(jnp.float32)
    xf = x.astype(jnp.float32)
    routing = jnp.einsum("od,bld->bol", w, xf) / math.sqrt(x.shape[-1])
    routing = jax.nn.softmax(routing, axis=-1)
    return jnp.einsum("bol,bld->bod", routing, xf)


if __name__ == "__main__":
    key = jax.random.PRNGKey(0)
    kx, kw = jax.random.split(key)

    # Small shapes consistent with the module.
    B, L, d_in, d_out, n_out = 2, 16, 32, 8, 1

    x = jax.random.normal(kx, (B, L, d_in), dtype=jnp.float32)

    # Deterministic xavier_uniform init for inducing_points (n_out, d_out, d_in).
    fan_in = d_out * d_in    # torch: size(1) * receptive_field
    fan_out = n_out * d_in   # torch: size(0) * receptive_field
    bound = math.sqrt(6.0 / (fan_in + fan_out))
    inducing_points = jax.random.uniform(
        kw, (n_out, d_out, d_in), dtype=jnp.float32, minval=-bound, maxval=bound
    )

    # f32 path.
    out = jax.block_until_ready(attention_pooling(x, inducing_points))
    ref = _reference(x, inducing_points)
    assert out.shape == (B, d_out, d_in)
    err = float(jnp.max(jnp.abs(out - ref)))
    assert jnp.allclose(out, ref, atol=1e-4, rtol=1e-4), f"f32 max abs err {err}"

    # bf16 path (looser tolerance: probabilities are cast to bf16 before the
    # pooling matmul; accumulation stays f32).
    x_bf16 = x.astype(jnp.bfloat16)
    out_bf16 = jax.block_until_ready(attention_pooling(x_bf16, inducing_points))
    ref_bf16 = _reference(x_bf16, inducing_points)
    err_bf16 = float(jnp.max(jnp.abs(out_bf16.astype(jnp.float32) - ref_bf16)))
    assert err_bf16 < 5e-2, f"bf16 max abs err {err_bf16}"

    print("KERNEL_OK")
</pallas_src>

<mosaic_0001>
module attributes {stable_mosaic.version = 11 : i64} {
  func.func @_attention_pooling_kernel(%arg0: i32, %arg1: memref<2x16x32xf32, #tpu.memory_space<vmem>>, %arg2: memref<8x32xf32, #tpu.memory_space<vmem>>, %arg3: memref<2x256xf32, #tpu.memory_space<vmem>>) attributes {dimension_semantics = [#tpu.dimension_semantics<parallel>], iteration_bounds = array<i64: 1>, scalar_prefetch = 0 : i64, scratch_operands = 0 : i64, tpu.core_type = #tpu.core_type<tc>, window_params = [{transform_indices = @transform_0, window_bounds = array<i64: 2, 16, 32>}, {pipeline_mode = #tpu.pipeline_mode<synchronous>, transform_indices = @transform_1, window_bounds = array<i64: 8, 32>}, {transform_indices = @transform_2, window_bounds = array<i64: 2, 256>}]} {
    %c0 = arith.constant 0 : index
    %c0_0 = arith.constant 0 : index
    %c0_1 = arith.constant 0 : index
    %0 = vector.load %arg1[%c0, %c0_0, %c0_1] : memref<2x16x32xf32, #tpu.memory_space<vmem>>, vector<2x16x32xf32>
    %c0_2 = arith.constant 0 : index
    %c0_3 = arith.constant 0 : index
    %1 = vector.load %arg2[%c0_2, %c0_3] : memref<8x32xf32, #tpu.memory_space<vmem>>, vector<8x32xf32>
    %2 = vector.shape_cast %1 : vector<8x32xf32> to vector<1x8x32xf32>
    %3 = vector.broadcast %2 : vector<1x8x32xf32> to vector<2x8x32xf32>
    %cst = arith.constant dense<0.000000e+00> : vector<2x8x16xf32>
    %4 = tpu.matmul %3, %0, %cst {dimension_numbers = #tpu.dot_dimension_numbers<[2], [2], [1], [1], [0, 0, 0, 1, 1, 1], [0], [0]>} : vector<2x8x32xf32>, vector<2x16x32xf32>, vector<2x8x16xf32> -> vector<2x8x16xf32>
    %cst_4 = arith.constant dense<0xFF800000> : vector<2x8xf32>
    %5 = vector.multi_reduction <maximumf>, %4, %cst_4 [2] : vector<2x8x16xf32> to vector<2x8xf32>
    %6 = vector.shape_cast %5 : vector<2x8xf32> to vector<2x8x1xf32>
    %7 = vector.broadcast %6 : vector<2x8x1xf32> to vector<2x8x16xf32>
    %8 = arith.subf %4, %7 : vector<2x8x16xf32>
    %9 = math.exp %8 : vector<2x8x16xf32>
    %cst_5 = arith.constant dense<0.000000e+00> : vector<2x8xf32>
    %10 = vector.multi_reduction <add>, %9, %cst_5 [2] : vector<2x8x16xf32> to vector<2x8xf32>
    %cst_6 = arith.constant dense<0.000000e+00> : vector<2x8x32xf32>
    %11 = tpu.matmul %9, %0, %cst_6 {dimension_numbers = #tpu.dot_dimension_numbers<[2], [1], [1], [2], [0, 0, 0, 1, 1, 2], [0], [0]>} : vector<2x8x16xf32>, vector<2x16x32xf32>, vector<2x8x32xf32> -> vector<2x8x32xf32>
    %12 = tpu.reciprocal %10 {approx = true} : vector<2x8xf32> -> vector<2x8xf32>
    %13 = arith.mulf %10, %12 : vector<2x8xf32>
    %cst_7 = arith.constant 2.000000e+00 : f32
    %14 = vector.broadcast %cst_7 : f32 to vector<2x8xf32>
    %15 = arith.subf %14, %13 : vector<2x8xf32>
    %16 = arith.mulf %12, %15 : vector<2x8xf32>
    %17 = vector.shape_cast %16 : vector<2x8xf32> to vector<2x8x1xf32>
    %18 = vector.broadcast %17 : vector<2x8x1xf32> to vector<2x8x32xf32>
    %19 = arith.mulf %11, %18 : vector<2x8x32xf32>
    %20 = vector.shape_cast %19 : vector<2x8x32xf32> to vector<2x256xf32>
    %c0_8 = arith.constant 0 : index
    %c0_9 = arith.constant 0 : index
    %21 = vector.load %arg3[%c0_8, %c0_9] : memref<2x256xf32, #tpu.memory_space<vmem>>, vector<2x256xf32>
    tpu.vector_store %arg3[%c0_8, %c0_9], %20 {strides = array<i32>} : memref<2x256xf32, #tpu.memory_space<vmem>>, vector<2x256xf32>,
    return
  }
  func.func @transform_0(%arg0: i32) -> (i32, i32, i32) {
    %c0_i32 = arith.constant 0 : i32
    %c0_i32_0 = arith.constant 0 : i32
    %c0_i32_1 = arith.constant 0 : i32
    return %arg0, %c0_i32, %c0_i32_0 : i32, i32, i32
  }
  func.func @transform_1(%arg0: i32) -> (i32, i32) {
    %c0_i32 = arith.constant 0 : i32
    %c0_i32_0 = arith.constant 0 : i32
    %c0_i32_1 = arith.constant 0 : i32
    return %c0_i32, %c0_i32_0 : i32, i32
  }
  func.func @transform_2(%arg0: i32) -> (i32, i32) {
    %c0_i32 = arith.constant 0 : i32
    %c0_i32_0 = arith.constant 0 : i32
    return %arg0, %c0_i32 : i32, i32
  }
}

</mosaic_0001>

<llo_original>
// kernel: tpu_custom_call.1
$region0: #{tpu_custom_call.1}
  #allocation0 [shape = 'u32[]', space=smem, size = 0x4, offset = 0x4, fixed_abs, tag = 'smem constant byte address 0x4 - core index']
  #allocation1 [shape = 'u32[144,128]{1,0:T(1,128)}', space=vmem, size = 0x12000, scoped, tag = 'internal scratch']
  %s0 = inlined_call_operand.hbm [shape: f32[2,16,32], index: 0, kind: input, shape index: {}]
  %s1 = inlined_call_operand.hbm [shape: f32[8,32], index: 1, kind: input, shape index: {}]
  %s2 = inlined_call_operand.hbm [shape: f32[2,256], index: 2, kind: output, shape index: {}]
  %s3 = sld [smem:[#allocation0]]
  $region26: #{tpu_custom_call.1} parent=0
    _
  %s5 = ssub.s32 1, %s3
  %s6 = scalar_select 0, %s5, %s3
  $region1: #{tpu_custom_call.1} parent=0
    #allocation2 [shape = 'u8[16384]{0}', space=vmem, size = 0x4000, scoped, tag = 'input window, operand 0, single buffered']
    #allocation3 [shape = 's32[1]{0}', space=sflag, size = 0x4, scoped, tag = 'scoped memory for tpu_custom_call.1']
    #allocation4 [shape = 's32[1]{0}', space=sflag, size = 0x4, scoped, tag = 'scoped memory for tpu_custom_call.1']
    #allocation5 [shape = 'u8[4096]{0}', space=vmem, size = 0x1000, scoped, tag = 'input window, operand 1, single buffered']
    #allocation6 [shape = 's32[1]{0}', space=sflag, size = 0x4, scoped, tag = 'scoped memory for tpu_custom_call.1']
    #allocation7 [shape = 'u8[2048]{0}', space=vmem, size = 0x800, scoped, tag = 'output window, operand 0, single buffered']
    %7 = vsyncpa [#allocation3], 0
    %8 = vsyncpa [#allocation6], 0
    %9 = vsyncpa [#allocation4], 0
    // Predicated region
    $region2: #{tpu_custom_call.1} parent=1 // pred_check
      _
    $region3: #{tpu_custom_call.1} parent=1 // pred_check_branch
      %11 = sbr.rel (0) target = $region5
    $region4: #{tpu_custom_call.1} parent=1 // pred_region
      %s13 = ssub.s32 512, 512
      %14 = vsyncadd [#allocation3], %s13
      %s15 = sshll.u32 [#allocation2], 4
      %s16 = int_to_ptr.vmem [resolvable:$true] %s15
      %21 = dma.hbm_to_vmem [thread:$0]  %s0, 512, %s16, [#allocation3], 128, 128, 8
    $region5: #{tpu_custom_call.1} parent=1 // pred_fallthru
      _
    // Predicated region
    $region6: #{tpu_custom_call.1} parent=1 // pred_check
      _
    $region7: #{tpu_custom_call.1} parent=1 // pred_check_branch
      %23 = sbr.rel (0) target = $region9
    $region8: #{tpu_custom_call.1} parent=1 // pred_region
      %s25 = ssub.s32 128, 128
      %26 = vsyncadd [#allocation6], %s25
      %s28 = sshll.u32 [#allocation5], 4
      %s29 = int_to_ptr.vmem [resolvable:$true] %s28
      %31 = dma.hbm_to_vmem [thread:$0]  %s1, 128, %s29, [#allocation6]
    $region9: #{tpu_custom_call.1} parent=1 // pred_fallthru
      _
    // Predicated region
    $region10: #{tpu_custom_call.1} parent=1 // pred_check
      _
    $region11: #{tpu_custom_call.1} parent=1 // pred_check_branch
      %33 = sbr.rel (0) target = $region13
    $region12: #{tpu_custom_call.1} parent=1 // pred_region
      %34 = dma.done [#allocation3], 512
    $region13: #{tpu_custom_call.1} parent=1 // pred_fallthru
      _
    // Predicated region
    $region14: #{tpu_custom_call.1} parent=1 // pred_check
      _
    $region15: #{tpu_custom_call.1} parent=1 // pred_check_branch
      %36 = sbr.rel (0) target = $region17
    $region16: #{tpu_custom_call.1} parent=1 // pred_region
      %37 = dma.done [#allocation6], 128
    $region17: #{tpu_custom_call.1} parent=1 // pred_fallthru
      _
    %v38 = vld [vmem:[#allocation2] sm:$0xff]
    %v39 = vld [vmem:[#allocation2 + $0x8] sm:$0xff]
    %v40 = vld [vmem:[#allocation2 + $0x10] sm:$0xff]
    %v41 = vld [vmem:[#allocation2 + $0x18] sm:$0xff]
    %v42 = vld [vmem:[#allocation5] sm:$0xff]
    %vm43 = vcmask 261120
    %v45 = vsel %vm43, %v42, 0
    %v48 = vsel %vm43, %v38, 0
    %v51 = vsel %vm43, %v39, 0
    %53 = vmatprep.subr.mxu0 0.0
    %54 = vmatpush1.xpose.msra.mxu0 %v48
    %55 = vmatprep.subr.mxu0 0.0
    %56 = vmatpush1.xpose.msra.mxu0 %v51
    %57 = vmatprep.subr.mxu0 0.0
    %58 = vmatpush1.xpose.msra.mxu0 0.0
    %59 = vmatprep.subr.mxu0 0.0
    %60 = vmatpush1.xpose.msra.mxu0 0.0
    %61 = vmatprep.subr.mxu0 0.0
    %62 = vmatpush1.xpose.msra.mxu0 0.0
    %63 = vmatprep.subr.mxu0 0.0
    %64 = vmatpush1.xpose.msra.mxu0 0.0
    %65 = vmatprep.subr.mxu0 0.0
    %66 = vmatpush1.xpose.msra.mxu0 0.0
    %67 = vmatprep.subr.mxu0 0.0
    %68 = vmatpush1.xpose.msra.mxu0 0.0
    %69 = vmatprep.subr.mxu0 0.0
    %70 = vmatpush1.xpose.msra.mxu0 0.0
    %71 = vmatprep.subr.mxu0 0.0
    %72 = vmatpush1.xpose.msra.mxu0 0.0
    %73 = vmatprep.subr.mxu0 0.0
    %74 = vmatpush1.xpose.msra.mxu0 0.0
    %75 = vmatprep.subr.mxu0 0.0
    %76 = vmatpush1.xpose.msra.mxu0 0.0
    %77 = vmatprep.subr.mxu0 0.0
    %78 = vmatpush1.xpose.msra.mxu0 0.0
    %79 = vmatprep.subr.mxu0 0.0
    %80 = vmatpush1.xpose.msra.mxu0 0.0
    %81 = vmatprep.subr.mxu0 0.0
    %82 = vmatpush1.xpose.msra.mxu0 0.0
    %83 = vmatprep.subr.mxu0 0.0
    %84 = vmatpush1.xpose.msra.mxu0 0.0
    %85 = vmatprep.subr.mxu0 0.0
    %86 = vmatpush1.xpose.msra.mxu0 0.0
    %87 = vmatprep.subr.mxu0 0.0
    %88 = vmatpush1.xpose.msra.mxu0 0.0
    %89 = vmatprep.subr.mxu0 0.0
    %90 = vmatpush1.xpose.msra.mxu0 0.0
    %91 = vmatprep.subr.mxu0 0.0
    %92 = vmatpush1.xpose.msra.mxu0 0.0
    %93 = vmatprep.subr.mxu0 0.0
    %94 = vmatpush1.xpose.msra.mxu0 0.0
    %95 = vmatprep.subr.mxu0 0.0
    %96 = vmatpush1.xpose.msra.mxu0 0.0
    %97 = vmatprep.subr.mxu0 0.0
    %98 = vmatpush1.xpose.msra.mxu0 0.0
    %99 = vmatprep.subr.mxu0 0.0
    %100 = vmatpush1.xpose.msra.mxu0 0.0
    %101 = vmatprep.subr.mxu0 0.0
    %102 = vmatpush1.xpose.msra.mxu0 0.0
    %103 = vmatprep.subr.mxu0 0.0
    %104 = vmatpush1.xpose.msra.mxu0 0.0
    %105 = vmatprep.subr.mxu0 0.0
    %106 = vmatpush1.xpose.msra.mxu0 0.0
    %107 = vmatprep.subr.mxu0 0.0
    %108 = vmatpush1.xpose.msra.mxu0 0.0
    %109 = vmatprep.subr.mxu0 0.0
    %110 = vmatpush1.xpose.msra.mxu0 0.0
    %111 = vmatprep.subr.mxu0 0.0
    %112 = vmatpush1.xpose.msra.mxu0 0.0
    %113 = vmatprep.subr.mxu0 0.0
    %114 = vmatpush1.xpose.msra.mxu0 0.0
    %115 = vmatprep.subr.mxu0 0.0
    %116 = vmatpush1.xpose.msra.mxu0 0.0
    %117 = vmatprep.mubr.f32.mxu0 0.0
    %118 = vmatmul.mubr.f32.gmra.mrb[0].mxu0 %v45
    %v119 = vpop.f32.mrb[0].mxu0
    %v120 = vadd.f32 0.0, %v119
    %v121 = vpop.f32.mrb[0].mxu0
    %122 = vdwg.mxu0
    %v124 = vsel %vm43, %v40, 0
    %v127 = vsel %vm43, %v41, 0
    %129 = vmatprep.subr.mxu0 0.0
    %130 = vmatpush1.xpose.msra.mxu0 %v124
    %131 = vmatprep.subr.mxu0 0.0
    %132 = vmatpush1.xpose.msra.mxu0 %v127
    %133 = vmatprep.subr.mxu0 0.0
    %134 = vmatpush1.xpose.msra.mxu0 0.0
    %135 = vmatprep.subr.mxu0 0.0
    %136 = vmatpush1.xpose.msra.mxu0 0.0
    %137 = vmatprep.subr.mxu0 0.0
    %138 = vmatpush1.xpose.msra.mxu0 0.0
    %139 = vmatprep.subr.mxu0 0.0
    %140 = vmatpush1.xpose.msra.mxu0 0.0
    %141 = vmatprep.subr.mxu0 0.0
    %142 = vmatpush1.xpose.msra.mxu0 0.0
    %143 = vmatprep.subr.mxu0 0.0
    %144 = vmatpush1.xpose.msra.mxu0 0.0
    %145 = vmatprep.subr.mxu0 0.0
    %146 = vmatpush1.xpose.msra.mxu0 0.0
    %147 = vmatprep.subr.mxu0 0.0
    %148 = vmatpush1.xpose.msra.mxu0 0.0
    %149 = vmatprep.subr.mxu0 0.0
    %150 = vmatpush1.xpose.msra.mxu0 0.0
    %151 = vmatprep.subr.mxu0 0.0
    %152 = vmatpush1.xpose.msra.mxu0 0.0
    %153 = vmatprep.subr.mxu0 0.0
    %154 = vmatpush1.xpose.msra.mxu0 0.0
    %155 = vmatprep.subr.mxu0 0.0
    %156 = vmatpush1.xpose.msra.mxu0 0.0
    %157 = vmatprep.subr.mxu0 0.0
    %158 = vmatpush1.xpose.msra.mxu0 0.0
    %159 = vmatprep.subr.mxu0 0.0
    %160 = vmatpush1.xpose.msra.mxu0 0.0
    %161 = vmatprep.subr.mxu0 0.0
    %162 = vmatpush1.xpose.msra.mxu0 0.0
    %163 = vmatprep.subr.mxu0 0.0
    %164 = vmatpush1.xpose.msra.mxu0 0.0
    %165 = vmatprep.subr.mxu0 0.0
    %166 = vmatpush1.xpose.msra.mxu0 0.0
    %167 = vmatprep.subr.mxu0 0.0
    %168 = vmatpush1.xpose.msra.mxu0 0.0
    %169 = vmatprep.subr.mxu0 0.0
    %170 = vmatpush1.xpose.msra.mxu0 0.0
    %171 = vmatprep.subr.mxu0 0.0
    %172 = vmatpush1.xpose.msra.mxu0 0.0
    %173 = vmatprep.subr.mxu0 0.0
    %174 = vmatpush1.xpose.msra.mxu0 0.0
    %175 = vmatprep.subr.mxu0 0.0
    %176 = vmatpush1.xpose.msra.mxu0 0.0
    %177 = vmatprep.subr.mxu0 0.0
    %178 = vmatpush1.xpose.msra.mxu0 0.0
    %179 = vmatprep.subr.mxu0 0.0
    %180 = vmatpush1.xpose.msra.mxu0 0.0
    %181 = vmatprep.subr.mxu0 0.0
    %182 = vmatpush1.xpose.msra.mxu0 0.0
    %183 = vmatprep.subr.mxu0 0.0
    %184 = vmatpush1.xpose.msra.mxu0 0.0
    %185 = vmatprep.subr.mxu0 0.0
    %186 = vmatpush1.xpose.msra.mxu0 0.0
    %187 = vmatprep.subr.mxu0 0.0
    %188 = vmatpush1.xpose.msra.mxu0 0.0
    %189 = vmatprep.subr.mxu0 0.0
    %190 = vmatpush1.xpose.msra.mxu0 0.0
    %191 = vmatprep.subr.mxu0 0.0
    %192 = vmatpush1.xpose.msra.mxu0 0.0
    %193 = vmatprep.mubr.f32.mxu0 0.0
    %194 = vmatmul.mubr.f32.gmra.mrb[0].mxu0 %v45
    %v195 = vpop.f32.mrb[0].mxu0
    %v196 = vadd.f32 0.0, %v195
    %v197 = vpop.f32.mrb[0].mxu0
    %198 = vdwg.mxu0
    %vm199 = vcmask 130048
    %v200 = vsel %vm199, %v120, -inf
    %201 = vmax.xlane.f32.xlu0 %v200
    %v202 = vpop.xlane.xlu0 %201
    %v203 = vsel %vm199, %v196, -inf
    %204 = vmax.xlane.f32.xlu0 %v203
    %v205 = vpop.xlane.xlu0 %204
    %v206 = vsub.f32 %v120, %v202
    %v207 = vsub.f32 %v196, %v205
    %v208 = vmul.f32 %v206, 1.442695
    %v209 = vpow.pop %v208
    %v210 = vmul.f32 %v207, 1.442695
    %v211 = vpow.pop %v210
    %v212 = vsel %vm199, %v209, 0.0
    %213 = vadd.xlane.f32.xlu0 %v212
    %v214 = vpop.xlane.xlu0 %213
    %v215 = vsel %vm199, %v211, 0.0
    %216 = vadd.xlane.f32.xlu0 %v215
    %v217 = vpop.xlane.xlu0 %216
    %v219 = vsel %vm199, %v209, 0
    %221 = vmatprep.subr.mxu0 0.0
    %222 = vmatpush1.msra.mxu0 %v38
    %223 = vmatprep.subr.mxu0 0.0
    %224 = vmatpush1.msra.mxu0 %v39
    %225 = vmatprep.subr.mxu0 0.0
    %226 = vmatpush1.msra.mxu0 0.0
    %227 = vmatprep.subr.mxu0 0.0
    %228 = vmatpush1.msra.mxu0 0.0
    %229 = vmatprep.subr.mxu0 0.0
    %230 = vmatpush1.msra.mxu0 0.0
    %231 = vmatprep.subr.mxu0 0.0
    %232 = vmatpush1.msra.mxu0 0.0
    %233 = vmatprep.subr.mxu0 0.0
    %234 = vmatpush1.msra.mxu0 0.0
    %235 = vmatprep.subr.mxu0 0.0
    %236 = vmatpush1.msra.mxu0 0.0
    %237 = vmatprep.subr.mxu0 0.0
    %238 = vmatpush1.msra.mxu0 0.0
    %239 = vmatprep.subr.mxu0 0.0
    %240 = vmatpush1.msra.mxu0 0.0
    %241 = vmatprep.subr.mxu0 0.0
    %242 = vmatpush1.msra.mxu0 0.0
    %243 = vmatprep.subr.mxu0 0.0
    %244 = vmatpush1.msra.mxu0 0.0
    %245 = vmatprep.subr.mxu0 0.0
    %246 = vmatpush1.msra.mxu0 0.0
    %247 = vmatprep.subr.mxu0 0.0
    %248 = vmatpush1.msra.mxu0 0.0
    %249 = vmatprep.subr.mxu0 0.0
    %250 = vmatpush1.msra.mxu0 0.0
    %251 = vmatprep.subr.mxu0 0.0
    %252 = vmatpush1.msra.mxu0 0.0
    %253 = vmatprep.subr.mxu0 0.0
    %254 = vmatpush1.msra.mxu0 0.0
    %255 = vmatprep.subr.mxu0 0.0
    %256 = vmatpush1.msra.mxu0 0.0
    %257 = vmatprep.subr.mxu0 0.0
    %258 = vmatpush1.msra.mxu0 0.0
    %259 = vmatprep.subr.mxu0 0.0
    %260 = vmatpush1.msra.mxu0 0.0
    %261 = vmatprep.subr.mxu0 0.0
    %262 = vmatpush1.msra.mxu0 0.0
    %263 = vmatprep.subr.mxu0 0.0
    %264 = vmatpush1.msra.mxu0 0.0
    %265 = vmatprep.subr.mxu0 0.0
    %266 = vmatpush1.msra.mxu0 0.0
    %267 = vmatprep.subr.mxu0 0.0
    %268 = vmatpush1.msra.mxu0 0.0
    %269 = vmatprep.subr.mxu0 0.0
    %270 = vmatpush1.msra.mxu0 0.0
    %271 = vmatprep.subr.mxu0 0.0
    %272 = vmatpush1.msra.mxu0 0.0
    %273 = vmatprep.subr.mxu0 0.0
    %274 = vmatpush1.msra.mxu0 0.0
    %275 = vmatprep.subr.mxu0 0.0
    %276 = vmatpush1.msra.mxu0 0.0
    %277 = vmatprep.subr.mxu0 0.0
    %278 = vmatpush1.msra.mxu0 0.0
    %279 = vmatprep.subr.mxu0 0.0
    %280 = vmatpush1.msra.mxu0 0.0
    %281 = vmatprep.subr.mxu0 0.0
    %282 = vmatpush1.msra.mxu0 0.0
    %283 = vmatprep.subr.mxu0 0.0
    %284 = vmatpush1.msra.mxu0 0.0
    %285 = vmatprep.mubr.f32.mxu0 0.0
    %286 = vmatmul.mubr.f32.gmra.mrb[0].mxu0 %v219
    %v287 = vpop.f32.mrb[0].mxu0
    %v288 = vadd.f32 0.0, %v287
    %v289 = vpop.f32.mrb[0].mxu0
    %290 = vdwg.mxu0
    %v292 = vsel %vm199, %v211, 0
    %294 = vmatprep.subr.mxu0 0.0
    %295 = vmatpush1.msra.mxu0 %v40
    %296 = vmatprep.subr.mxu0 0.0
    %297 = vmatpush1.msra.mxu0 %v41
    %298 = vmatprep.subr.mxu0 0.0
    %299 = vmatpush1.msra.mxu0 0.0
    %300 = vmatprep.subr.mxu0 0.0
    %301 = vmatpush1.msra.mxu0 0.0
    %302 = vmatprep.subr.mxu0 0.0
    %303 = vmatpush1.msra.mxu0 0.0
    %304 = vmatprep.subr.mxu0 0.0
    %305 = vmatpush1.msra.mxu0 0.0
    %306 = vmatprep.subr.mxu0 0.0
    %307 = vmatpush1.msra.mxu0 0.0
    %308 = vmatprep.subr.mxu0 0.0
    %309 = vmatpush1.msra.mxu0 0.0
    %310 = vmatprep.subr.mxu0 0.0
    %311 = vmatpush1.msra.mxu0 0.0
    %312 = vmatprep.subr.mxu0 0.0
    %313 = vmatpush1.msra.mxu0 0.0
    %314 = vmatprep.subr.mxu0 0.0
    %315 = vmatpush1.msra.mxu0 0.0
    %316 = vmatprep.subr.mxu0 0.0
    %317 = vmatpush1.msra.mxu0 0.0
    %318 = vmatprep.subr.mxu0 0.0
    %319 = vmatpush1.msra.mxu0 0.0
    %320 = vmatprep.subr.mxu0 0.0
    %321 = vmatpush1.msra.mxu0 0.0
    %322 = vmatprep.subr.mxu0 0.0
    %323 = vmatpush1.msra.mxu0 0.0
    %324 = vmatprep.subr.mxu0 0.0
    %325 = vmatpush1.msra.mxu0 0.0
    %326 = vmatprep.subr.mxu0 0.0
    %327 = vmatpush1.msra.mxu0 0.0
    %328 = vmatprep.subr.mxu0 0.0
    %329 = vmatpush1.msra.mxu0 0.0
    %330 = vmatprep.subr.mxu0 0.0
    %331 = vmatpush1.msra.mxu0 0.0
    %332 = vmatprep.subr.mxu0 0.0
    %333 = vmatpush1.msra.mxu0 0.0
    %334 = vmatprep.subr.mxu0 0.0
    %335 = vmatpush1.msra.mxu0 0.0
    %336 = vmatprep.subr.mxu0 0.0
    %337 = vmatpush1.msra.mxu0 0.0
    %338 = vmatprep.subr.mxu0 0.0
    %339 = vmatpush1.msra.mxu0 0.0
    %340 = vmatprep.subr.mxu0 0.0
    %341 = vmatpush1.msra.mxu0 0.0
    %342 = vmatprep.subr.mxu0 0.0
    %343 = vmatpush1.msra.mxu0 0.0
    %344 = vmatprep.subr.mxu0 0.0
    %345 = vmatpush1.msra.mxu0 0.0
    %346 = vmatprep.subr.mxu0 0.0
    %347 = vmatpush1.msra.mxu0 0.0
    %348 = vmatprep.subr.mxu0 0.0
    %349 = vmatpush1.msra.mxu0 0.0
    %350 = vmatprep.subr.mxu0 0.0
    %351 = vmatpush1.msra.mxu0 0.0
    %352 = vmatprep.subr.mxu0 0.0
    %353 = vmatpush1.msra.mxu0 0.0
    %354 = vmatprep.subr.mxu0 0.0
    %355 = vmatpush1.msra.mxu0 0.0
    %356 = vmatprep.subr.mxu0 0.0
    %357 = vmatpush1.msra.mxu0 0.0
    %358 = vmatprep.mubr.f32.mxu0 0.0
    %359 = vmatmul.mubr.f32.gmra.mrb[0].mxu0 %v292
    %v360 = vpop.f32.mrb[0].mxu0
    %v361 = vadd.f32 0.0, %v360
    %v362 = vpop.f32.mrb[0].mxu0
    %363 = vdwg.mxu0
    %v364 = vrcp.pop %v214
    %v365 = vrcp.pop %v217
    %v366 = vmul.f32 %v214, %v364
    %v367 = vmul.f32 %v217, %v365
    %v368 = vsub.f32 2.0, %v366
    %v369 = vsub.f32 2.0, %v367
    %v370 = vmul.f32 %v364, %v368
    %v371 = vmul.f32 %v365, %v369
    %v372 = vmul.f32 %v288, %v370
    %v373 = vmul.f32 %v361, %v371
    %v374 = vcombine.high %v372, 0.0
    %v376 = vunpack.c.l.s4 1983009808
    %v377 = vunpack.c.0.s8 %v376
    %v378 = vlaneseq
    %v379 = vshrl.u32 %v378, 7
    %v380 = vsub.s32 %v377, %v379
    %v381 = vrot.slane %v372, %v380
    %v383 = vunpack.c.l.s4 1983009808
    %v384 = vunpack.c.0.s8 %v383
    %v385 = vlaneseq
    %v386 = vshrl.u32 %v385, 7
    %v387 = vsub.s32 %v384, %v386
    %v388 = vrot.slane %v374, %v387
    %v389 = vcombine.high %v373, 0.0
    %v391 = vunpack.c.l.s4 1983009808
    %v392 = vunpack.c.0.s8 %v391
    %v393 = vlaneseq
    %v394 = vshrl.u32 %v393, 7
    %v395 = vsub.s32 %v392, %v394
    %v396 = vrot.slane %v373, %v395
    %v398 = vunpack.c.l.s4 1983009808
    %v399 = vunpack.c.0.s8 %v398
    %v400 = vlaneseq
    %v401 = vshrl.u32 %v400, 7
    %v402 = vsub.s32 %v399, %v401
    %v403 = vrot.slane %v389, %v402
    %v404 = vcombine.low %v381, %v396
    %v405 = vcombine.high %v381, %v396
    %v407 = vunpack.c.l.s4 1934713408
    %v408 = vunpack.c.0.s8 %v407
    %v409 = vlaneseq
    %v410 = vshrl.u32 %v409, 7
    %v411 = vsub.s32 %v408, %v410
    %v412 = vrot.slane %v404, %v411
    %v414 = vunpack.c.l.s4 1934713408
    %v415 = vunpack.c.0.s8 %v414
    %v416 = vlaneseq
    %v417 = vshrl.u32 %v416, 7
    %v418 = vsub.s32 %v415, %v417
    %v419 = vrot.slane %v405, %v418
    %v420 = vcombine.low %v388, %v403
    %v421 = vcombine.high %v388, %v403
    %v423 = vunpack.c.l.s4 1934713408
    %v424 = vunpack.c.0.s8 %v423
    %v425 = vlaneseq
    %v426 = vshrl.u32 %v425, 7
    %v427 = vsub.s32 %v424, %v426
    %v428 = vrot.slane %v420, %v427
    %v430 = vunpack.c.l.s4 1934713408
    %v431 = vunpack.c.0.s8 %v430
    %v432 = vlaneseq
    %v433 = vshrl.u32 %v432, 7
    %v434 = vsub.s32 %v431, %v433
    %v435 = vrot.slane %v421, %v434
    %v436 = vcombine.high %v412, 0.0
    %v437 = vcombine.high %v419, 0.0
    %v438 = vcombine.high %v428, 0.0
    %v439 = vcombine.high %v435, 0.0
    %441 = vrot.lane.b32.xlu0 %v436, 32
    %v442 = vpop.permute.xlu0 %441
    %445 = vrot.lane.b32.xlu0 %v419, 64
    %v446 = vpop.permute.xlu0 %445
    %449 = vrot.lane.b32.xlu0 %v437, 96
    %v450 = vpop.permute.xlu0 %449
    %453 = vrot.lane.b32.xlu0 %v438, 32
    %v454 = vpop.permute.xlu0 %453
    %457 = vrot.lane.b32.xlu0 %v435, 64
    %v458 = vpop.permute.xlu0 %457
    %461 = vrot.lane.b32.xlu0 %v439, 96
    %v462 = vpop.permute.xlu0 %461
    %v464 = vsel %vm43, %v412, %v442
    %vm465 = vcmask 523264
    %v466 = vsel %vm465, %v464, %v446
    %vm467 = vcmask 785408
    %v468 = vsel %vm467, %v466, %v450
    %v469 = vsel %vm43, %v428, %v454
    %v470 = vsel %vm465, %v469, %v458
    %v471 = vsel %vm467, %v470, %v462
    %v474 = vcombine.low %v468, %v471
    %v476 = vunpack.c.l.s4 1983009808
    %v477 = vunpack.c.0.s8 %v476
    %v478 = vlaneseq
    %v479 = vshrl.u32 %v478, 7
    %v480 = vsub.s32 %v477, %v479
    %v481 = vrot.slane %v474, %v480
    %483 = vst [vmem:[#allocation7] sm:$0xf] %v481
    // Predicated region
    $region18: #{tpu_custom_call.1} parent=1 // pred_check
      _
    $region19: #{tpu_custom_call.1} parent=1 // pred_check_branch
      %485 = sbr.rel (0) target = $region21
    $region20: #{tpu_custom_call.1} parent=1 // pred_region
      %s487 = ssub.s32 64, 64
      %488 = vsyncadd [#allocation4], %s487
      %s490 = sshll.u32 [#allocation7], 4
      %s491 = int_to_ptr.vmem [resolvable:$true] %s490
      %493 = dma.vmem_to_hbm [thread:$0]  %s491, 64, %s2, [#allocation4]
    $region21: #{tpu_custom_call.1} parent=1 // pred_fallthru
      _
    // Predicated region
    $region22: #{tpu_custom_call.1} parent=1 // pred_check
      _
    $region23: #{tpu_custom_call.1} parent=1 // pred_check_branch
      %495 = sbr.rel (0) target = $region25
    $region24: #{tpu_custom_call.1} parent=1 // pred_region
      %496 = dma.done [#allocation4], 64
    $region25: #{tpu_custom_call.1} parent=1 // pred_fallthru
      _
    %497 = vsyncpa [#allocation3], 1
    %498 = vsyncpa [#allocation6], 1
    %499 = vsyncpa [#allocation4], 1

</llo_original>
